<compile_context>
chip_gen: v5e
topology: v5e:2x2
jax: 0.10.0
libtpu: 0.0.40
codegen_flags: <defaults>
</compile_context>

<pallas_src>
import jax
import jax.numpy as jnp
from jax.experimental import pallas as pl
from jax.experimental.pallas import tpu as pltpu

WINDOW_SIZE = 20
IN_DIM = 3
HIDDEN = 64


def _round_up(v, m):
    return (v + m - 1) // m * m


def decoder_kernel(x_ref, w1_ref, b1_ref, w2_ref, b2_ref, o_ref):
    # x_ref : (IN_DIM, TB)          batch on the lane axis
    # w1_ref: (HIDDEN, IN_DIM)      PyTorch layout (out_features, in_features)
    # b1_ref: (HIDDEN, 1)
    # w2_ref: (WINDOW_SIZE, HIDDEN)
    # b2_ref: (WINDOW_SIZE, 1)
    # o_ref : (WINDOW_SIZE, TB)     out.T, lane-dense
    x = x_ref[...]
    w1 = w1_ref[...]

    # Layer 1 on the VPU: K=3 is far too small for the MXU; three broadcast
    # multiply-adds fill otherwise-idle VALU slots and avoid an MXU round trip.
    h = (w1[:, 0:1] * x[0:1, :]
         + w1[:, 1:2] * x[1:2, :]
         + w1[:, 2:3] * x[2:3, :]
         + b1_ref[...])                       # (HIDDEN, TB)
    h = jnp.maximum(h, 0.0)

    # Layer 2 on the MXU: (20,64) @ (64,TB) -> (20,TB), f32 accumulation,
    # output lane-dense in the batch dimension.
    out = jnp.dot(w2_ref[...], h, preferred_element_type=jnp.float32) + b2_ref[...]
    o_ref[...] = out.astype(o_ref.dtype)


def decoder_forward(x, w1, b1, w2, b2):
    """x: (B, 3); params in PyTorch layout: w1 (64,3), b1 (64,), w2 (20,64), b2 (20,)."""
    B = x.shape[0]
    # Batch tile: at least 128 lanes; up to 512 rows per step for large B.
    TB = min(512, max(128, _round_up(B, 128)))
    B_pad = _round_up(B, TB)

    # Transpose + zero-pad batch once in the wrapper (layout plumbing, not compute).
    xt = jnp.zeros((IN_DIM, B_pad), jnp.float32).at[:, :B].set(x.T.astype(jnp.float32))
    b1c = b1.reshape(HIDDEN, 1).astype(jnp.float32)
    b2c = b2.reshape(WINDOW_SIZE, 1).astype(jnp.float32)

    grid = (B_pad // TB,)
    out_t = pl.pallas_call(
        decoder_kernel,
        out_shape=jax.ShapeDtypeStruct((WINDOW_SIZE, B_pad), jnp.float32),
        grid=grid,
        in_specs=[
            pl.BlockSpec((IN_DIM, TB), lambda i: (0, i)),          # x.T tiles over batch
            pl.BlockSpec((HIDDEN, IN_DIM), lambda i: (0, 0)),      # VMEM-resident weights
            pl.BlockSpec((HIDDEN, 1), lambda i: (0, 0)),
            pl.BlockSpec((WINDOW_SIZE, HIDDEN), lambda i: (0, 0)),
            pl.BlockSpec((WINDOW_SIZE, 1), lambda i: (0, 0)),
        ],
        out_specs=pl.BlockSpec((WINDOW_SIZE, TB), lambda i: (0, i)),
        compiler_params=pltpu.CompilerParams(
            dimension_semantics=("parallel",)),                    # megacore on v7x
    )(xt, w1.astype(jnp.float32), b1c, w2.astype(jnp.float32), b2c)

    # Drop batch padding, return (B, WINDOW_SIZE) like the PyTorch module.
    return out_t[:, :B].T


def reference_forward(x, w1, b1, w2, b2):
    # PyTorch semantics: y = relu(x @ W1.T + b1) @ W2.T + b2
    h = jnp.maximum(
        jnp.dot(x, w1.T, precision=jax.lax.Precision.HIGHEST) + b1, 0.0)
    return jnp.dot(h, w2.T, precision=jax.lax.Precision.HIGHEST) + b2


if __name__ == "__main__":
    key = jax.random.PRNGKey(0)
    k_x, k_w1, k_b1, k_w2, k_b2 = jax.random.split(key, 5)

    B = 8  # batch of latent codes, each of dim 3 (as implied by Linear(3, 64))
    x = jax.random.normal(k_x, (B, IN_DIM), dtype=jnp.float32)

    # Deterministic parameter init, PyTorch Linear layout (out_features, in_features).
    bound1 = 1.0 / (IN_DIM ** 0.5)
    w1 = jax.random.uniform(k_w1, (HIDDEN, IN_DIM), jnp.float32, -bound1, bound1)
    b1 = jax.random.uniform(k_b1, (HIDDEN,), jnp.float32, -bound1, bound1)
    bound2 = 1.0 / (HIDDEN ** 0.5)
    w2 = jax.random.uniform(k_w2, (WINDOW_SIZE, HIDDEN), jnp.float32, -bound2, bound2)
    b2 = jax.random.uniform(k_b2, (WINDOW_SIZE,), jnp.float32, -bound2, bound2)

    out = decoder_forward(x, w1, b1, w2, b2)
    out = jax.block_until_ready(out)

    ref = reference_forward(x, w1, b1, w2, b2)
    assert out.shape == (B, WINDOW_SIZE), out.shape
    assert jnp.allclose(out, ref, atol=1e-4, rtol=1e-4), "mismatch vs reference"

    print("KERNEL_OK")
</pallas_src>

<mosaic_0001>
module attributes {stable_mosaic.version = 11 : i64} {
  func.func @decoder_kernel(%arg0: i32, %arg1: memref<3x128xf32, #tpu.memory_space<vmem>>, %arg2: memref<64x3xf32, #tpu.memory_space<vmem>>, %arg3: memref<64x1xf32, #tpu.memory_space<vmem>>, %arg4: memref<20x64xf32, #tpu.memory_space<vmem>>, %arg5: memref<20x1xf32, #tpu.memory_space<vmem>>, %arg6: memref<20x128xf32, #tpu.memory_space<vmem>>) attributes {dimension_semantics = [#tpu.dimension_semantics<parallel>], iteration_bounds = array<i64: 1>, scalar_prefetch = 0 : i64, scratch_operands = 0 : i64, tpu.core_type = #tpu.core_type<tc>, window_params = [{transform_indices = @transform_0, window_bounds = array<i64: 3, 128>}, {pipeline_mode = #tpu.pipeline_mode<synchronous>, transform_indices = @transform_1, window_bounds = array<i64: 64, 3>}, {pipeline_mode = #tpu.pipeline_mode<synchronous>, transform_indices = @transform_2, window_bounds = array<i64: 64, 1>}, {pipeline_mode = #tpu.pipeline_mode<synchronous>, transform_indices = @transform_3, window_bounds = array<i64: 20, 64>}, {pipeline_mode = #tpu.pipeline_mode<synchronous>, transform_indices = @transform_4, window_bounds = array<i64: 20, 1>}, {transform_indices = @transform_5, window_bounds = array<i64: 20, 128>}]} {
    %c0 = arith.constant 0 : index
    %c0_0 = arith.constant 0 : index
    %0 = vector.load %arg1[%c0, %c0_0] : memref<3x128xf32, #tpu.memory_space<vmem>>, vector<3x128xf32>
    %c0_1 = arith.constant 0 : index
    %c0_2 = arith.constant 0 : index
    %1 = vector.load %arg2[%c0_1, %c0_2] : memref<64x3xf32, #tpu.memory_space<vmem>>, vector<64x3xf32>
    %2 = vector.extract_strided_slice %1 {offsets = [0, 0], sizes = [64, 1], strides = [1, 1]} : vector<64x3xf32> to vector<64x1xf32>
    %3 = vector.extract_strided_slice %0 {offsets = [0, 0], sizes = [1, 128], strides = [1, 1]} : vector<3x128xf32> to vector<1x128xf32>
    %4 = vector.broadcast %2 : vector<64x1xf32> to vector<64x128xf32>
    %5 = vector.broadcast %3 : vector<1x128xf32> to vector<64x128xf32>
    %6 = arith.mulf %4, %5 : vector<64x128xf32>
    %7 = vector.extract_strided_slice %1 {offsets = [0, 1], sizes = [64, 1], strides = [1, 1]} : vector<64x3xf32> to vector<64x1xf32>
    %8 = vector.extract_strided_slice %0 {offsets = [1, 0], sizes = [1, 128], strides = [1, 1]} : vector<3x128xf32> to vector<1x128xf32>
    %9 = vector.broadcast %7 : vector<64x1xf32> to vector<64x128xf32>
    %10 = vector.broadcast %8 : vector<1x128xf32> to vector<64x128xf32>
    %11 = arith.mulf %9, %10 : vector<64x128xf32>
    %12 = arith.addf %6, %11 : vector<64x128xf32>
    %13 = vector.extract_strided_slice %1 {offsets = [0, 2], sizes = [64, 1], strides = [1, 1]} : vector<64x3xf32> to vector<64x1xf32>
    %14 = vector.extract_strided_slice %0 {offsets = [2, 0], sizes = [1, 128], strides = [1, 1]} : vector<3x128xf32> to vector<1x128xf32>
    %15 = vector.broadcast %13 : vector<64x1xf32> to vector<64x128xf32>
    %16 = vector.broadcast %14 : vector<1x128xf32> to vector<64x128xf32>
    %17 = arith.mulf %15, %16 : vector<64x128xf32>
    %18 = arith.addf %12, %17 : vector<64x128xf32>
    %c0_3 = arith.constant 0 : index
    %c0_4 = arith.constant 0 : index
    %19 = vector.load %arg3[%c0_3, %c0_4] : memref<64x1xf32, #tpu.memory_space<vmem>>, vector<64x1xf32>
    %20 = vector.broadcast %19 : vector<64x1xf32> to vector<64x128xf32>
    %21 = arith.addf %18, %20 : vector<64x128xf32>
    %cst = arith.constant 0.000000e+00 : f32
    %22 = vector.broadcast %cst : f32 to vector<64x128xf32>
    %23 = arith.maximumf %21, %22 : vector<64x128xf32>
    %c0_5 = arith.constant 0 : index
    %c0_6 = arith.constant 0 : index
    %24 = vector.load %arg4[%c0_5, %c0_6] : memref<20x64xf32, #tpu.memory_space<vmem>>, vector<20x64xf32>
    %cst_7 = arith.constant dense<0.000000e+00> : vector<20x128xf32>
    %25 = tpu.matmul %24, %23, %cst_7 {dimension_numbers = #tpu.dot_dimension_numbers<[1], [0], [0], [1], [0, 0, 1, 1], [], []>} : vector<20x64xf32>, vector<64x128xf32>, vector<20x128xf32> -> vector<20x128xf32>
    %c0_8 = arith.constant 0 : index
    %c0_9 = arith.constant 0 : index
    %26 = vector.load %arg5[%c0_8, %c0_9] : memref<20x1xf32, #tpu.memory_space<vmem>>, vector<20x1xf32>
    %27 = vector.broadcast %26 : vector<20x1xf32> to vector<20x128xf32>
    %28 = arith.addf %25, %27 : vector<20x128xf32>
    %c0_10 = arith.constant 0 : index
    %c0_11 = arith.constant 0 : index
    %29 = vector.load %arg6[%c0_10, %c0_11] : memref<20x128xf32, #tpu.memory_space<vmem>>, vector<20x128xf32>
    tpu.vector_store %arg6[%c0_10, %c0_11], %28 {strides = array<i32>} : memref<20x128xf32, #tpu.memory_space<vmem>>, vector<20x128xf32>,
    return
  }
  func.func @transform_0(%arg0: i32) -> (i32, i32) {
    %c0_i32 = arith.constant 0 : i32
    %c0_i32_0 = arith.constant 0 : i32
    return %c0_i32, %arg0 : i32, i32
  }
  func.func @transform_1(%arg0: i32) -> (i32, i32) {
    %c0_i32 = arith.constant 0 : i32
    %c0_i32_0 = arith.constant 0 : i32
    %c0_i32_1 = arith.constant 0 : i32
    return %c0_i32, %c0_i32_0 : i32, i32
  }
  func.func @transform_2(%arg0: i32) -> (i32, i32) {
    %c0_i32 = arith.constant 0 : i32
    %c0_i32_0 = arith.constant 0 : i32
    %c0_i32_1 = arith.constant 0 : i32
    return %c0_i32, %c0_i32_0 : i32, i32
  }
  func.func @transform_3(%arg0: i32) -> (i32, i32) {
    %c0_i32 = arith.constant 0 : i32
    %c0_i32_0 = arith.constant 0 : i32
    %c0_i32_1 = arith.constant 0 : i32
    return %c0_i32, %c0_i32_0 : i32, i32
  }
  func.func @transform_4(%arg0: i32) -> (i32, i32) {
    %c0_i32 = arith.constant 0 : i32
    %c0_i32_0 = arith.constant 0 : i32
    %c0_i32_1 = arith.constant 0 : i32
    return %c0_i32, %c0_i32_0 : i32, i32
  }
  func.func @transform_5(%arg0: i32) -> (i32, i32) {
    %c0_i32 = arith.constant 0 : i32
    %c0_i32_0 = arith.constant 0 : i32
    return %c0_i32, %arg0 : i32, i32
  }
}

</mosaic_0001>

<llo_original>
// kernel: tpu_custom_call.1
$region0: #{tpu_custom_call.1}
  #allocation0 [shape = 'u32[]', space=smem, size = 0x4, offset = 0x4, fixed_abs, tag = 'smem constant byte address 0x4 - core index']
  #allocation1 [shape = 'u32[72,128]{1,0:T(1,128)}', space=vmem, size = 0x9000, scoped, tag = 'internal scratch']
  %s0 = inlined_call_operand.vmem [shape: f32[3,128], index: 0, kind: input, shape index: {}]
  %s1 = inlined_call_operand.vmem [shape: f32[64,3], index: 1, kind: input, shape index: {}]
  %s2 = inlined_call_operand.vmem [shape: f32[64,1], index: 2, kind: input, shape index: {}]
  %s3 = inlined_call_operand.vmem [shape: f32[20,64], index: 3, kind: input, shape index: {}]
  %s4 = inlined_call_operand.vmem [shape: f32[20,1], index: 4, kind: input, shape index: {}]
  %s5 = inlined_call_operand.hbm [shape: f32[20,128], index: 5, kind: output, shape index: {}]
  %s6 = sld [smem:[#allocation0]]
  $region30: #{tpu_custom_call.1} parent=0
    _
  %s8 = ssub.s32 1, %s6
  %s9 = scalar_select 0, %s8, %s6
  $region1: #{tpu_custom_call.1} parent=0
    #allocation2 [shape = 'u8[12288]{0}', space=vmem, size = 0x3000, scoped, tag = 'output window, operand 0, single buffered']
    #allocation3 [shape = 's32[1]{0}', space=sflag, size = 0x4, scoped, tag = 'scoped memory for tpu_custom_call.1']
    %10 = vsyncpa [#allocation3], 0
    // Predicated region
    $region2: #{tpu_custom_call.1} parent=1 // pred_check
      _
    $region3: #{tpu_custom_call.1} parent=1 // pred_check_branch
      %12 = sbr.rel (0) target = $region5
    $region4: #{tpu_custom_call.1} parent=1 // pred_region
      _
    $region5: #{tpu_custom_call.1} parent=1 // pred_fallthru
      _
    // Predicated region
    $region6: #{tpu_custom_call.1} parent=1 // pred_check
      _
    $region7: #{tpu_custom_call.1} parent=1 // pred_check_branch
      %14 = sbr.rel (0) target = $region9
    $region8: #{tpu_custom_call.1} parent=1 // pred_region
      _
    $region9: #{tpu_custom_call.1} parent=1 // pred_fallthru
      _
    // Predicated region
    $region10: #{tpu_custom_call.1} parent=1 // pred_check
      _
    $region11: #{tpu_custom_call.1} parent=1 // pred_check_branch
      %16 = sbr.rel (0) target = $region13
    $region12: #{tpu_custom_call.1} parent=1 // pred_region
      _
    $region13: #{tpu_custom_call.1} parent=1 // pred_fallthru
      _
    // Predicated region
    $region14: #{tpu_custom_call.1} parent=1 // pred_check
      _
    $region15: #{tpu_custom_call.1} parent=1 // pred_check_branch
      %18 = sbr.rel (0) target = $region17
    $region16: #{tpu_custom_call.1} parent=1 // pred_region
      _
    $region17: #{tpu_custom_call.1} parent=1 // pred_fallthru
      _
    // Predicated region
    $region18: #{tpu_custom_call.1} parent=1 // pred_check
      _
    $region19: #{tpu_custom_call.1} parent=1 // pred_check_branch
      %20 = sbr.rel (0) target = $region21
    $region20: #{tpu_custom_call.1} parent=1 // pred_region
      _
    $region21: #{tpu_custom_call.1} parent=1 // pred_fallthru
      _
    %v21 = vld [vmem:[%s0] sm:$0x7]
    %v22 = vld [vmem:[%s1] sm:$0xff]
    %v23 = vld [vmem:[%s1 + $0x8] sm:$0xff]
    %v24 = vld [vmem:[%s1 + $0x10] sm:$0xff]
    %v25 = vld [vmem:[%s1 + $0x18] sm:$0xff]
    %v26 = vld [vmem:[%s1 + $0x20] sm:$0xff]
    %v27 = vld [vmem:[%s1 + $0x28] sm:$0xff]
    %v28 = vld [vmem:[%s1 + $0x30] sm:$0xff]
    %v29 = vld [vmem:[%s1 + $0x38] sm:$0xff]
    %31 = vset.pattern.permute.xlu0 0
    %32 = vperm.xlu0 %31, %v22
    %v33 = vpop.permute.xlu0 %32
    %36 = vset.pattern.permute.xlu0 0
    %37 = vperm.xlu0 %36, %v23
    %v38 = vpop.permute.xlu0 %37
    %41 = vset.pattern.permute.xlu0 0
    %42 = vperm.xlu0 %41, %v24
    %v43 = vpop.permute.xlu0 %42
    %46 = vset.pattern.permute.xlu0 0
    %47 = vperm.xlu0 %46, %v25
    %v48 = vpop.permute.xlu0 %47
    %51 = vset.pattern.permute.xlu0 0
    %52 = vperm.xlu0 %51, %v26
    %v53 = vpop.permute.xlu0 %52
    %56 = vset.pattern.permute.xlu0 0
    %57 = vperm.xlu0 %56, %v27
    %v58 = vpop.permute.xlu0 %57
    %61 = vset.pattern.permute.xlu0 0
    %62 = vperm.xlu0 %61, %v28
    %v63 = vpop.permute.xlu0 %62
    %66 = vset.pattern.permute.xlu0 0
    %67 = vperm.xlu0 %66, %v29
    %v68 = vpop.permute.xlu0 %67
    %v70 = vperm.slane %v21, 0
    %v71 = vmul.f32 %v33, %v70
    %v72 = vmul.f32 %v38, %v70
    %v73 = vmul.f32 %v43, %v70
    %v74 = vmul.f32 %v48, %v70
    %v75 = vmul.f32 %v53, %v70
    %v76 = vmul.f32 %v58, %v70
    %v77 = vmul.f32 %v63, %v70
    %v78 = vmul.f32 %v68, %v70
    %79 = vset.pattern.permute.xlu0 1
    %80 = vperm.xlu0 %79, %v22
    %v81 = vpop.permute.xlu0 %80
    %83 = vset.pattern.permute.xlu0 1
    %84 = vperm.xlu0 %83, %v23
    %v85 = vpop.permute.xlu0 %84
    %87 = vset.pattern.permute.xlu0 1
    %88 = vperm.xlu0 %87, %v24
    %v89 = vpop.permute.xlu0 %88
    %91 = vset.pattern.permute.xlu0 1
    %92 = vperm.xlu0 %91, %v25
    %v93 = vpop.permute.xlu0 %92
    %95 = vset.pattern.permute.xlu0 1
    %96 = vperm.xlu0 %95, %v26
    %v97 = vpop.permute.xlu0 %96
    %99 = vset.pattern.permute.xlu0 1
    %100 = vperm.xlu0 %99, %v27
    %v101 = vpop.permute.xlu0 %100
    %103 = vset.pattern.permute.xlu0 1
    %104 = vperm.xlu0 %103, %v28
    %v105 = vpop.permute.xlu0 %104
    %107 = vset.pattern.permute.xlu0 1
    %108 = vperm.xlu0 %107, %v29
    %v109 = vpop.permute.xlu0 %108
    %v111 = vperm.slane %v21, 1
    %v112 = vmul.f32 %v81, %v111
    %v113 = vmul.f32 %v85, %v111
    %v114 = vmul.f32 %v89, %v111
    %v115 = vmul.f32 %v93, %v111
    %v116 = vmul.f32 %v97, %v111
    %v117 = vmul.f32 %v101, %v111
    %v118 = vmul.f32 %v105, %v111
    %v119 = vmul.f32 %v109, %v111
    %v120 = vadd.f32 %v71, %v112
    %v121 = vadd.f32 %v72, %v113
    %v122 = vadd.f32 %v73, %v114
    %v123 = vadd.f32 %v74, %v115
    %v124 = vadd.f32 %v75, %v116
    %v125 = vadd.f32 %v76, %v117
    %v126 = vadd.f32 %v77, %v118
    %v127 = vadd.f32 %v78, %v119
    %128 = vset.pattern.permute.xlu0 2
    %129 = vperm.xlu0 %128, %v22
    %v130 = vpop.permute.xlu0 %129
    %132 = vset.pattern.permute.xlu0 2
    %133 = vperm.xlu0 %132, %v23
    %v134 = vpop.permute.xlu0 %133
    %136 = vset.pattern.permute.xlu0 2
    %137 = vperm.xlu0 %136, %v24
    %v138 = vpop.permute.xlu0 %137
    %140 = vset.pattern.permute.xlu0 2
    %141 = vperm.xlu0 %140, %v25
    %v142 = vpop.permute.xlu0 %141
    %144 = vset.pattern.permute.xlu0 2
    %145 = vperm.xlu0 %144, %v26
    %v146 = vpop.permute.xlu0 %145
    %148 = vset.pattern.permute.xlu0 2
    %149 = vperm.xlu0 %148, %v27
    %v150 = vpop.permute.xlu0 %149
    %152 = vset.pattern.permute.xlu0 2
    %153 = vperm.xlu0 %152, %v28
    %v154 = vpop.permute.xlu0 %153
    %156 = vset.pattern.permute.xlu0 2
    %157 = vperm.xlu0 %156, %v29
    %v158 = vpop.permute.xlu0 %157
    %v160 = vperm.slane %v21, 2
    %v161 = vmul.f32 %v130, %v160
    %v162 = vmul.f32 %v134, %v160
    %v163 = vmul.f32 %v138, %v160
    %v164 = vmul.f32 %v142, %v160
    %v165 = vmul.f32 %v146, %v160
    %v166 = vmul.f32 %v150, %v160
    %v167 = vmul.f32 %v154, %v160
    %v168 = vmul.f32 %v158, %v160
    %v169 = vadd.f32 %v120, %v161
    %v170 = vadd.f32 %v121, %v162
    %v171 = vadd.f32 %v122, %v163
    %v172 = vadd.f32 %v123, %v164
    %v173 = vadd.f32 %v124, %v165
    %v174 = vadd.f32 %v125, %v166
    %v175 = vadd.f32 %v126, %v167
    %v176 = vadd.f32 %v127, %v168
    %v177 = vld [vmem:[%s2] sm:$0xff]
    %v178 = vld [vmem:[%s2 + $0x8] sm:$0xff]
    %v179 = vld [vmem:[%s2 + $0x10] sm:$0xff]
    %v180 = vld [vmem:[%s2 + $0x18] sm:$0xff]
    %v181 = vld [vmem:[%s2 + $0x20] sm:$0xff]
    %v182 = vld [vmem:[%s2 + $0x28] sm:$0xff]
    %v183 = vld [vmem:[%s2 + $0x30] sm:$0xff]
    %v184 = vld [vmem:[%s2 + $0x38] sm:$0xff]
    %186 = vset.pattern.permute.xlu0 0
    %187 = vperm.xlu0 %186, %v177
    %v188 = vpop.permute.xlu0 %187
    %191 = vset.pattern.permute.xlu0 0
    %192 = vperm.xlu0 %191, %v178
    %v193 = vpop.permute.xlu0 %192
    %196 = vset.pattern.permute.xlu0 0
    %197 = vperm.xlu0 %196, %v179
    %v198 = vpop.permute.xlu0 %197
    %201 = vset.pattern.permute.xlu0 0
    %202 = vperm.xlu0 %201, %v180
    %v203 = vpop.permute.xlu0 %202
    %206 = vset.pattern.permute.xlu0 0
    %207 = vperm.xlu0 %206, %v181
    %v208 = vpop.permute.xlu0 %207
    %211 = vset.pattern.permute.xlu0 0
    %212 = vperm.xlu0 %211, %v182
    %v213 = vpop.permute.xlu0 %212
    %216 = vset.pattern.permute.xlu0 0
    %217 = vperm.xlu0 %216, %v183
    %v218 = vpop.permute.xlu0 %217
    %221 = vset.pattern.permute.xlu0 0
    %222 = vperm.xlu0 %221, %v184
    %v223 = vpop.permute.xlu0 %222
    %v225 = vadd.f32 %v169, %v188
    %v226 = vadd.f32 %v170, %v193
    %v227 = vadd.f32 %v171, %v198
    %v228 = vadd.f32 %v172, %v203
    %v229 = vadd.f32 %v173, %v208
    %v230 = vadd.f32 %v174, %v213
    %v231 = vadd.f32 %v175, %v218
    %v232 = vadd.f32 %v176, %v223
    %v233 = vmax.f32 %v225, 0.0
    %v234 = vmax.f32 %v226, 0.0
    %v235 = vmax.f32 %v227, 0.0
    %v236 = vmax.f32 %v228, 0.0
    %v237 = vmax.f32 %v229, 0.0
    %v238 = vmax.f32 %v230, 0.0
    %v239 = vmax.f32 %v231, 0.0
    %v240 = vmax.f32 %v232, 0.0
    %v241 = vld [vmem:[%s3] sm:$0xff]
    %v242 = vld [vmem:[%s3 + $0x8] sm:$0xff]
    %v243 = vld [vmem:[%s3 + $0x10] sm:$0xf]
    %v244 = vld [vmem:[%s4] sm:$0xff]
    %v245 = vld [vmem:[%s4 + $0x8] sm:$0xff]
    %v246 = vld [vmem:[%s4 + $0x10] sm:$0xf]
    %248 = vset.pattern.permute.xlu0 0
    %249 = vperm.xlu0 %248, %v244
    %v250 = vpop.permute.xlu0 %249
    %253 = vset.pattern.permute.xlu0 0
    %254 = vperm.xlu0 %253, %v245
    %v255 = vpop.permute.xlu0 %254
    %258 = vset.pattern.permute.xlu0 0
    %259 = vperm.xlu0 %258, %v246
    %v260 = vpop.permute.xlu0 %259
    %vm262 = vcmask 523264
    %v264 = vsel %vm262, %v241, 0
    %v267 = vsel %vm262, %v242, 0
    %v270 = vsel %vm262, %v243, 0
    %272 = vmatpush.msra.mxu0 0.0
    %273 = vmatpush.msra.mxu0 0.0
    %274 = vmatpush.msra.mxu0 0.0
    %275 = vmatpush.msra.mxu0 0.0
    %276 = vmatpush.msra.mxu0 0.0
    %277 = vmatpush.msra.mxu0 0.0
    %278 = vmatpush.msra.mxu0 0.0
    %279 = vmatpush.msra.mxu0 0.0
    %280 = vmatpush.msra.mxu0 %v240
    %281 = vmatpush.msra.mxu0 %v239
    %282 = vmatpush.msra.mxu0 %v238
    %283 = vmatpush.msra.mxu0 %v237
    %284 = vmatpush.msra.mxu0 %v236
    %285 = vmatpush.msra.mxu0 %v235
    %286 = vmatpush.msra.mxu0 %v234
    %287 = vmatpush.msra.mxu0 %v233
    %288 = vmatmul.f32.gmra.mxu0 %v264
    %v289 = vpop.f32.mrf.mxu0
    %v290 = vadd.f32 %v250, %v289
    %291 = vmatmul.f32.gmra.mxu0 %v267
    %v292 = vpop.f32.mrf.mxu0
    %v293 = vadd.f32 %v255, %v292
    %294 = vmatmul.f32.gmra.mxu0 %v270
    %v295 = vpop.f32.mrf.mxu0
    %v296 = vadd.f32 %v260, %v295
    %297 = vdwg.mxu0
    %298 = vst [vmem:[#allocation2] sm:$0xff] %v290
    %299 = vst [vmem:[#allocation2 + $0x8] sm:$0xff] %v293
    %300 = vst [vmem:[#allocation2 + $0x10] sm:$0xf] %v296
    // Predicated region
    $region22: #{tpu_custom_call.1} parent=1 // pred_check
      _
    $region23: #{tpu_custom_call.1} parent=1 // pred_check_branch
      %302 = sbr.rel (0) target = $region25
    $region24: #{tpu_custom_call.1} parent=1 // pred_region
      %304 = vsyncadd [#allocation3], 0
      %s305 = sshll.u32 [#allocation2], 4
      %s306 = int_to_ptr.vmem [resolvable:$true] %s305
      %s307 = sshll.u32 %s5, 4
      %s308 = int_to_ptr.hbm [resolvable:$true] %s307
      %313 = dma.vmem_to_hbm [thread:$0]  %s306, 384, %s308, [#allocation3], 128, 128, 8
    $region25: #{tpu_custom_call.1} parent=1 // pred_fallthru
      _
    // Predicated region
    $region26: #{tpu_custom_call.1} parent=1 // pred_check
      _
    $region27: #{tpu_custom_call.1} parent=1 // pred_check_branch
      %315 = sbr.rel (0) target = $region29
    $region28: #{tpu_custom_call.1} parent=1 // pred_region
      %317 = dma.done [#allocation3], 384
    $region29: #{tpu_custom_call.1} parent=1 // pred_fallthru
      _
    %318 = vsyncpa [#allocation3], 1

</llo_original>
